<compile_context>
chip_gen: v7x
topology: tpu7x:2x2x1
jax: 0.10.0
libtpu: 0.0.40
codegen_flags: <defaults>
</compile_context>

<pallas_src>
import jax
import jax.numpy as jnp
from jax.experimental import pallas as pl
from jax.experimental.pallas import tpu as pltpu
import numpy as np


def block_kernel(x_ref, w1_ref, b1_ref, w2_ref, b2_ref, o_ref):
    # One batch tile per grid step; weights/biases fully resident in VMEM.
    x = x_ref[...]                       # keep input dtype (bf16 ok on MXU)
    # L1 + tanh (f32 accumulate, f32 tanh)
    h = jnp.tanh(
        jnp.dot(x, w1_ref[...], preferred_element_type=jnp.float32)
        + b1_ref[...].astype(jnp.float32)
    )
    # L2 + tanh
    y = jnp.tanh(
        jnp.dot(h.astype(w2_ref.dtype), w2_ref[...],
                preferred_element_type=jnp.float32)
        + b2_ref[...].astype(jnp.float32)
    )
    # residual add
    o_ref[...] = (y + x.astype(jnp.float32)).astype(o_ref.dtype)


def _round_up(n, m):
    return ((n + m - 1) // m) * m


def block_forward(x, w1, b1, w2, b2, *, bm=None):
    """x: (B, in_N); w1: (in_N, width); b1: (width,); w2: (width, out_N); b2: (out_N,)."""
    B, in_N = x.shape
    width = w1.shape[1]
    out_N = w2.shape[1]
    assert out_N == in_N, "residual add requires out_N == in_N"

    # --- lane-dense padding of feature dims to multiples of 128 -------------
    in_Np = _round_up(in_N, 128)
    width_p = _round_up(width, 128)
    out_Np = _round_up(out_N, 128)

    # --- batch tile: as large as reasonable; whole batch for small B --------
    if bm is None:
        bm = min(_round_up(B, 8), 512)
    bm = _round_up(bm, 8)
    Bp = _round_up(B, bm)

    # Zero-pad (exact: padded rows/cols contribute 0 through the whole block).
    xp = jnp.zeros((Bp, in_Np), x.dtype).at[:B, :in_N].set(x)
    w1p = jnp.zeros((in_Np, width_p), w1.dtype).at[:in_N, :width].set(w1)
    b1p = jnp.zeros((1, width_p), b1.dtype).at[0, :width].set(b1)
    w2p = jnp.zeros((width_p, out_Np), w2.dtype).at[:width, :out_N].set(w2)
    b2p = jnp.zeros((1, out_Np), b2.dtype).at[0, :out_N].set(b2)

    grid = (Bp // bm,)
    itemsize = xp.dtype.itemsize

    cost = pl.CostEstimate(
        flops=2 * Bp * (in_Np * width_p + width_p * out_Np),
        transcendentals=Bp * (width_p + out_Np),
        bytes_accessed=(
            (xp.size + w1p.size + b1p.size + w2p.size + b2p.size) * itemsize
            + Bp * out_Np * itemsize
        ),
    )

    # TODO(synk): for large width/in_N on v7x (64 MiB VMEM), set
    # vmem_limit_bytes explicitly and single-buffer the resident weights
    # (pipeline_mode=pl.Buffered(1)); unnecessary at these sizes.
    out = pl.pallas_call(
        block_kernel,
        out_shape=jax.ShapeDtypeStruct((Bp, out_Np), x.dtype),
        grid_spec=pltpu.PrefetchScalarGridSpec(
            num_scalar_prefetch=0,
            grid=grid,
            in_specs=[
                pl.BlockSpec((bm, in_Np), lambda i: (i, 0)),       # x tile
                pl.BlockSpec((in_Np, width_p), lambda i: (0, 0)),  # W1 (resident)
                pl.BlockSpec((1, width_p), lambda i: (0, 0)),      # b1
                pl.BlockSpec((width_p, out_Np), lambda i: (0, 0)), # W2 (resident)
                pl.BlockSpec((1, out_Np), lambda i: (0, 0)),       # b2
            ],
            out_specs=pl.BlockSpec((bm, out_Np), lambda i: (i, 0)),
        ),
        compiler_params=pltpu.CompilerParams(
            dimension_semantics=("parallel",),
        ),
        cost_estimate=cost,
    )(xp, w1p, b1p, w2p, b2p)

    # Strip the padding.
    return out[:B, :out_N]


if __name__ == "__main__":
    # Small shapes implied by the module: Block(in_N, width, out_N) with
    # out_N == in_N (residual). in_N = out_N = 32, width = 64, batch = 16.
    in_N, width, out_N = 32, 64, 32
    B = 16

    key = jax.random.PRNGKey(0)
    kx, kw1, kb1, kw2, kb2 = jax.random.split(key, 5)

    # Deterministic param init mimicking nn.Linear's uniform(-1/sqrt(fan_in), +).
    bound1 = 1.0 / np.sqrt(in_N)
    bound2 = 1.0 / np.sqrt(width)
    w1 = jax.random.uniform(kw1, (in_N, width), jnp.float32, -bound1, bound1)
    b1 = jax.random.uniform(kb1, (width,), jnp.float32, -bound1, bound1)
    w2 = jax.random.uniform(kw2, (width, out_N), jnp.float32, -bound2, bound2)
    b2 = jax.random.uniform(kb2, (out_N,), jnp.float32, -bound2, bound2)

    x = jax.random.normal(kx, (B, in_N), jnp.float32)

    out = block_forward(x, w1, b1, w2, b2)
    out = jax.block_until_ready(out)

    # Pure-JAX reference check.
    ref = jnp.tanh(jnp.tanh(x @ w1 + b1) @ w2 + b2) + x
    np.testing.assert_allclose(np.asarray(out), np.asarray(ref), rtol=1e-5, atol=1e-5)

    print("KERNEL_OK")
</pallas_src>

<mosaic_0001>
module attributes {stable_mosaic.version = 11 : i64} {
  func.func @block_kernel(%arg0: i32, %arg1: memref<16x128xf32, #tpu.memory_space<vmem>>, %arg2: memref<128x128xf32, #tpu.memory_space<vmem>>, %arg3: memref<1x128xf32, #tpu.memory_space<vmem>>, %arg4: memref<128x128xf32, #tpu.memory_space<vmem>>, %arg5: memref<1x128xf32, #tpu.memory_space<vmem>>, %arg6: memref<16x128xf32, #tpu.memory_space<vmem>>) attributes {dimension_semantics = [#tpu.dimension_semantics<parallel>], iteration_bounds = array<i64: 1>, scalar_prefetch = 0 : i64, scratch_operands = 0 : i64, tpu.core_type = #tpu.core_type<tc>, window_params = [{transform_indices = @transform_0, window_bounds = array<i64: 16, 128>}, {pipeline_mode = #tpu.pipeline_mode<synchronous>, transform_indices = @transform_1, window_bounds = array<i64: 128, 128>}, {pipeline_mode = #tpu.pipeline_mode<synchronous>, transform_indices = @transform_2, window_bounds = array<i64: 1, 128>}, {pipeline_mode = #tpu.pipeline_mode<synchronous>, transform_indices = @transform_3, window_bounds = array<i64: 128, 128>}, {pipeline_mode = #tpu.pipeline_mode<synchronous>, transform_indices = @transform_4, window_bounds = array<i64: 1, 128>}, {transform_indices = @transform_5, window_bounds = array<i64: 16, 128>}]} {
    %c0 = arith.constant 0 : index
    %c0_0 = arith.constant 0 : index
    %0 = vector.load %arg1[%c0, %c0_0] : memref<16x128xf32, #tpu.memory_space<vmem>>, vector<16x128xf32>
    %c0_1 = arith.constant 0 : index
    %c0_2 = arith.constant 0 : index
    %1 = vector.load %arg2[%c0_1, %c0_2] : memref<128x128xf32, #tpu.memory_space<vmem>>, vector<128x128xf32>
    %cst = arith.constant dense<0.000000e+00> : vector<16x128xf32>
    %2 = tpu.matmul %0, %1, %cst {dimension_numbers = #tpu.dot_dimension_numbers<[1], [0], [0], [1], [0, 0, 1, 1], [], []>} : vector<16x128xf32>, vector<128x128xf32>, vector<16x128xf32> -> vector<16x128xf32>
    %c0_3 = arith.constant 0 : index
    %c0_4 = arith.constant 0 : index
    %3 = vector.load %arg3[%c0_3, %c0_4] : memref<1x128xf32, #tpu.memory_space<vmem>>, vector<1x128xf32>
    %4 = vector.broadcast %3 : vector<1x128xf32> to vector<16x128xf32>
    %5 = arith.addf %2, %4 : vector<16x128xf32>
    %6 = math.tanh %5 : vector<16x128xf32>
    %c0_5 = arith.constant 0 : index
    %c0_6 = arith.constant 0 : index
    %7 = vector.load %arg4[%c0_5, %c0_6] : memref<128x128xf32, #tpu.memory_space<vmem>>, vector<128x128xf32>
    %cst_7 = arith.constant dense<0.000000e+00> : vector<16x128xf32>
    %8 = tpu.matmul %6, %7, %cst_7 {dimension_numbers = #tpu.dot_dimension_numbers<[1], [0], [0], [1], [0, 0, 1, 1], [], []>} : vector<16x128xf32>, vector<128x128xf32>, vector<16x128xf32> -> vector<16x128xf32>
    %c0_8 = arith.constant 0 : index
    %c0_9 = arith.constant 0 : index
    %9 = vector.load %arg5[%c0_8, %c0_9] : memref<1x128xf32, #tpu.memory_space<vmem>>, vector<1x128xf32>
    %10 = vector.broadcast %9 : vector<1x128xf32> to vector<16x128xf32>
    %11 = arith.addf %8, %10 : vector<16x128xf32>
    %12 = math.tanh %11 : vector<16x128xf32>
    %13 = arith.addf %12, %0 : vector<16x128xf32>
    %c0_10 = arith.constant 0 : index
    %c0_11 = arith.constant 0 : index
    %14 = vector.load %arg6[%c0_10, %c0_11] : memref<16x128xf32, #tpu.memory_space<vmem>>, vector<16x128xf32>
    tpu.vector_store %arg6[%c0_10, %c0_11], %13 {strides = array<i32>} : memref<16x128xf32, #tpu.memory_space<vmem>>, vector<16x128xf32>,
    return
  }
  func.func @transform_0(%arg0: i32) -> (i32, i32) {
    %c0_i32 = arith.constant 0 : i32
    %c0_i32_0 = arith.constant 0 : i32
    return %arg0, %c0_i32 : i32, i32
  }
  func.func @transform_1(%arg0: i32) -> (i32, i32) {
    %c0_i32 = arith.constant 0 : i32
    %c0_i32_0 = arith.constant 0 : i32
    %c0_i32_1 = arith.constant 0 : i32
    return %c0_i32, %c0_i32_0 : i32, i32
  }
  func.func @transform_2(%arg0: i32) -> (i32, i32) {
    %c0_i32 = arith.constant 0 : i32
    %c0_i32_0 = arith.constant 0 : i32
    %c0_i32_1 = arith.constant 0 : i32
    return %c0_i32, %c0_i32_0 : i32, i32
  }
  func.func @transform_3(%arg0: i32) -> (i32, i32) {
    %c0_i32 = arith.constant 0 : i32
    %c0_i32_0 = arith.constant 0 : i32
    %c0_i32_1 = arith.constant 0 : i32
    return %c0_i32, %c0_i32_0 : i32, i32
  }
  func.func @transform_4(%arg0: i32) -> (i32, i32) {
    %c0_i32 = arith.constant 0 : i32
    %c0_i32_0 = arith.constant 0 : i32
    %c0_i32_1 = arith.constant 0 : i32
    return %c0_i32, %c0_i32_0 : i32, i32
  }
  func.func @transform_5(%arg0: i32) -> (i32, i32) {
    %c0_i32 = arith.constant 0 : i32
    %c0_i32_0 = arith.constant 0 : i32
    return %arg0, %c0_i32 : i32, i32
  }
}

</mosaic_0001>

<llo_original>
// kernel: tpu_custom_call.1
$region0: #{tpu_custom_call.1}
  #allocation0 [shape = 'u32[]', space=smem, size = 0x4, offset = 0x4, fixed_abs, tag = 'smem constant byte address 0x4 - core index']
  #allocation1 [shape = 'u32[144,128]{1,0:T(1,128)}', space=vmem, size = 0x12000, scoped, tag = 'internal scratch']
  %s0 = inlined_call_operand.hbm [shape: f32[16,128], index: 0, kind: input, shape index: {}]
  %s1 = inlined_call_operand.hbm [shape: f32[128,128], index: 1, kind: input, shape index: {}]
  %s2 = inlined_call_operand.vmem [shape: f32[1,128], index: 2, kind: input, shape index: {}]
  %s3 = inlined_call_operand.hbm [shape: f32[128,128], index: 3, kind: input, shape index: {}]
  %s4 = inlined_call_operand.vmem [shape: f32[1,128], index: 4, kind: input, shape index: {}]
  %s5 = inlined_call_operand.hbm [shape: f32[16,128], index: 5, kind: output, shape index: {}]
  %s6 = sld [smem:[#allocation0]]
  $region42: #{tpu_custom_call.1} parent=0
    _
  %s8 = ssub.s32 1, %s6
  %s9 = scalar_select 0, %s8, %s6
  $region1: #{tpu_custom_call.1} parent=0
    #allocation2 [shape = 'u8[8192]{0}', space=vmem, size = 0x2000, scoped, tag = 'input window, operand 0, single buffered']
    #allocation3 [shape = 's32[1]{0}', space=sflag, size = 0x4, scoped, tag = 'scoped memory for tpu_custom_call.1']
    #allocation4 [shape = 's32[1]{0}', space=sflag, size = 0x4, scoped, tag = 'scoped memory for tpu_custom_call.1']
    #allocation5 [shape = 'u8[65536]{0}', space=vmem, size = 0x10000, scoped, tag = 'input window, operand 1, single buffered']
    #allocation6 [shape = 's32[1]{0}', space=sflag, size = 0x4, scoped, tag = 'scoped memory for tpu_custom_call.1']
    #allocation7 [shape = 'u8[65536]{0}', space=vmem, size = 0x10000, scoped, tag = 'input window, operand 3, single buffered']
    #allocation8 [shape = 'u8[8192]{0}', space=vmem, size = 0x2000, scoped, tag = 'output window, operand 0, single buffered']
    %10 = vsyncpa [#allocation3], 0
    %11 = vsyncpa [#allocation6], 0
    %12 = vsyncpa [#allocation4], 0
    // Predicated region
    $region2: #{tpu_custom_call.1} parent=1 // pred_check
      _
    $region3: #{tpu_custom_call.1} parent=1 // pred_check_branch
      %14 = sbr.rel (0) target = $region5
    $region4: #{tpu_custom_call.1} parent=1 // pred_region
      %s16 = ssub.s32 256, 256
      %17 = vsyncadd [#allocation3], %s16
      %s18 = sshll.u32 [#allocation2], 4
      %s19 = int_to_ptr.vmem [resolvable:$true] %s18
      %24 = dma.hbm_to_vmem [thread:$0]  %s0, 256, %s19, [#allocation3], 128, 128, 8
    $region5: #{tpu_custom_call.1} parent=1 // pred_fallthru
      _
    // Predicated region
    $region6: #{tpu_custom_call.1} parent=1 // pred_check
      _
    $region7: #{tpu_custom_call.1} parent=1 // pred_check_branch
      %26 = sbr.rel (0) target = $region9
    $region8: #{tpu_custom_call.1} parent=1 // pred_region
      %s28 = ssub.s32 2048, 2048
      %29 = vsyncadd [#allocation6], %s28
      %s30 = sshll.u32 [#allocation5], 4
      %s31 = int_to_ptr.vmem [resolvable:$true] %s30
      %36 = dma.hbm_to_vmem [thread:$0]  %s1, 2048, %s31, [#allocation6], 128, 128, 8
    $region9: #{tpu_custom_call.1} parent=1 // pred_fallthru
      _
    // Predicated region
    $region10: #{tpu_custom_call.1} parent=1 // pred_check
      _
    $region11: #{tpu_custom_call.1} parent=1 // pred_check_branch
      %38 = sbr.rel (0) target = $region13
    $region12: #{tpu_custom_call.1} parent=1 // pred_region
      _
    $region13: #{tpu_custom_call.1} parent=1 // pred_fallthru
      _
    // Predicated region
    $region14: #{tpu_custom_call.1} parent=1 // pred_check
      _
    $region15: #{tpu_custom_call.1} parent=1 // pred_check_branch
      %40 = sbr.rel (0) target = $region17
    $region16: #{tpu_custom_call.1} parent=1 // pred_region
      %s42 = ssub.s32 2048, 2048
      %43 = vsyncadd [#allocation6], %s42
      %s44 = sshll.u32 [#allocation7], 4
      %s45 = int_to_ptr.vmem [resolvable:$true] %s44
      %50 = dma.hbm_to_vmem [thread:$0]  %s3, 2048, %s45, [#allocation6], 128, 128, 8
    $region17: #{tpu_custom_call.1} parent=1 // pred_fallthru
      _
    // Predicated region
    $region18: #{tpu_custom_call.1} parent=1 // pred_check
      _
    $region19: #{tpu_custom_call.1} parent=1 // pred_check_branch
      %52 = sbr.rel (0) target = $region21
    $region20: #{tpu_custom_call.1} parent=1 // pred_region
      _
    $region21: #{tpu_custom_call.1} parent=1 // pred_fallthru
      _
    // Predicated region
    $region22: #{tpu_custom_call.1} parent=1 // pred_check
      _
    $region23: #{tpu_custom_call.1} parent=1 // pred_check_branch
      %54 = sbr.rel (0) target = $region25
    $region24: #{tpu_custom_call.1} parent=1 // pred_region
      %55 = dma.done [#allocation3], 256
    $region25: #{tpu_custom_call.1} parent=1 // pred_fallthru
      _
    // Predicated region
    $region26: #{tpu_custom_call.1} parent=1 // pred_check
      _
    $region27: #{tpu_custom_call.1} parent=1 // pred_check_branch
      %57 = sbr.rel (0) target = $region29
    $region28: #{tpu_custom_call.1} parent=1 // pred_region
      %58 = dma.done [#allocation6], 2048
    $region29: #{tpu_custom_call.1} parent=1 // pred_fallthru
      _
    // Predicated region
    $region30: #{tpu_custom_call.1} parent=1 // pred_check
      _
    $region31: #{tpu_custom_call.1} parent=1 // pred_check_branch
      %60 = sbr.rel (0) target = $region33
    $region32: #{tpu_custom_call.1} parent=1 // pred_region
      %61 = dma.done [#allocation6], 2048
    $region33: #{tpu_custom_call.1} parent=1 // pred_fallthru
      _
    %v62 = vld [vmem:[#allocation2] sm:$0xff]
    %v63 = vld [vmem:[#allocation2 + $0x8] sm:$0xff]
    %v64 = vld [vmem:[#allocation5] sm:$0xff]
    %v65 = vld [vmem:[#allocation5 + $0x8] sm:$0xff]
    %v66 = vld [vmem:[#allocation5 + $0x10] sm:$0xff]
    %v67 = vld [vmem:[#allocation5 + $0x18] sm:$0xff]
    %v68 = vld [vmem:[#allocation5 + $0x20] sm:$0xff]
    %v69 = vld [vmem:[#allocation5 + $0x28] sm:$0xff]
    %v70 = vld [vmem:[#allocation5 + $0x30] sm:$0xff]
    %v71 = vld [vmem:[#allocation5 + $0x38] sm:$0xff]
    %v72 = vld [vmem:[#allocation5 + $0x40] sm:$0xff]
    %v73 = vld [vmem:[#allocation5 + $0x48] sm:$0xff]
    %v74 = vld [vmem:[#allocation5 + $0x50] sm:$0xff]
    %v75 = vld [vmem:[#allocation5 + $0x58] sm:$0xff]
    %v76 = vld [vmem:[#allocation5 + $0x60] sm:$0xff]
    %v77 = vld [vmem:[#allocation5 + $0x68] sm:$0xff]
    %v78 = vld [vmem:[#allocation5 + $0x70] sm:$0xff]
    %v79 = vld [vmem:[#allocation5 + $0x78] sm:$0xff]
    %v80 = vld [vmem:[%s2] sm:$0x1]
    %v82 = vlaneseq
    %v83 = vshrl.u32 %v82, 7
    %v84 = vsub.s32 0, %v83
    %v85 = vrot.slane %v80, %v84
    %87 = vmatprep.subr.mxu0 0.0
    %88 = vmatpush1.msra.mxu0 %v64
    %89 = vmatprep.subr.mxu0 0.0
    %90 = vmatpush1.msra.mxu0 %v65
    %91 = vmatprep.subr.mxu0 0.0
    %92 = vmatpush1.msra.mxu0 %v66
    %93 = vmatprep.subr.mxu0 0.0
    %94 = vmatpush1.msra.mxu0 %v67
    %95 = vmatprep.subr.mxu0 0.0
    %96 = vmatpush1.msra.mxu0 %v68
    %97 = vmatprep.subr.mxu0 0.0
    %98 = vmatpush1.msra.mxu0 %v69
    %99 = vmatprep.subr.mxu0 0.0
    %100 = vmatpush1.msra.mxu0 %v70
    %101 = vmatprep.subr.mxu0 0.0
    %102 = vmatpush1.msra.mxu0 %v71
    %103 = vmatprep.subr.mxu0 0.0
    %104 = vmatpush1.msra.mxu0 %v72
    %105 = vmatprep.subr.mxu0 0.0
    %106 = vmatpush1.msra.mxu0 %v73
    %107 = vmatprep.subr.mxu0 0.0
    %108 = vmatpush1.msra.mxu0 %v74
    %109 = vmatprep.subr.mxu0 0.0
    %110 = vmatpush1.msra.mxu0 %v75
    %111 = vmatprep.subr.mxu0 0.0
    %112 = vmatpush1.msra.mxu0 %v76
    %113 = vmatprep.subr.mxu0 0.0
    %114 = vmatpush1.msra.mxu0 %v77
    %115 = vmatprep.subr.mxu0 0.0
    %116 = vmatpush1.msra.mxu0 %v78
    %117 = vmatprep.subr.mxu0 0.0
    %118 = vmatpush1.msra.mxu0 %v79
    %119 = vmatprep.subr.mxu0 0.0
    %120 = vmatpush1.msra.mxu0 0.0
    %121 = vmatprep.subr.mxu0 0.0
    %122 = vmatpush1.msra.mxu0 0.0
    %123 = vmatprep.subr.mxu0 0.0
    %124 = vmatpush1.msra.mxu0 0.0
    %125 = vmatprep.subr.mxu0 0.0
    %126 = vmatpush1.msra.mxu0 0.0
    %127 = vmatprep.subr.mxu0 0.0
    %128 = vmatpush1.msra.mxu0 0.0
    %129 = vmatprep.subr.mxu0 0.0
    %130 = vmatpush1.msra.mxu0 0.0
    %131 = vmatprep.subr.mxu0 0.0
    %132 = vmatpush1.msra.mxu0 0.0
    %133 = vmatprep.subr.mxu0 0.0
    %134 = vmatpush1.msra.mxu0 0.0
    %135 = vmatprep.subr.mxu0 0.0
    %136 = vmatpush1.msra.mxu0 0.0
    %137 = vmatprep.subr.mxu0 0.0
    %138 = vmatpush1.msra.mxu0 0.0
    %139 = vmatprep.subr.mxu0 0.0
    %140 = vmatpush1.msra.mxu0 0.0
    %141 = vmatprep.subr.mxu0 0.0
    %142 = vmatpush1.msra.mxu0 0.0
    %143 = vmatprep.subr.mxu0 0.0
    %144 = vmatpush1.msra.mxu0 0.0
    %145 = vmatprep.subr.mxu0 0.0
    %146 = vmatpush1.msra.mxu0 0.0
    %147 = vmatprep.subr.mxu0 0.0
    %148 = vmatpush1.msra.mxu0 0.0
    %149 = vmatprep.subr.mxu0 0.0
    %150 = vmatpush1.msra.mxu0 0.0
    %151 = vmatprep.mubr.f32.mxu0 0.0
    %152 = vmatmul.mubr.f32.gmra.mrb[0].mxu0 %v62
    %v153 = vpop.f32.mrb[0].mxu0
    %v154 = vadd.f32 %v85, %v153
    %v155 = vpop.f32.mrb[0].mxu0
    %156 = vmatprep.mubr.f32.mxu0 0.0
    %157 = vmatmul.mubr.f32.gmra.mrb[0].mxu0 %v63
    %v158 = vpop.f32.mrb[0].mxu0
    %v159 = vadd.f32 %v85, %v158
    %v160 = vpop.f32.mrb[0].mxu0
    %161 = vdwg.mxu0
    %v162 = vtanh.pop %v154
    %v163 = vtanh.pop %v159
    %v164 = vld [vmem:[#allocation7] sm:$0xff]
    %v165 = vld [vmem:[#allocation7 + $0x8] sm:$0xff]
    %v166 = vld [vmem:[#allocation7 + $0x10] sm:$0xff]
    %v167 = vld [vmem:[#allocation7 + $0x18] sm:$0xff]
    %v168 = vld [vmem:[#allocation7 + $0x20] sm:$0xff]
    %v169 = vld [vmem:[#allocation7 + $0x28] sm:$0xff]
    %v170 = vld [vmem:[#allocation7 + $0x30] sm:$0xff]
    %v171 = vld [vmem:[#allocation7 + $0x38] sm:$0xff]
    %v172 = vld [vmem:[#allocation7 + $0x40] sm:$0xff]
    %v173 = vld [vmem:[#allocation7 + $0x48] sm:$0xff]
    %v174 = vld [vmem:[#allocation7 + $0x50] sm:$0xff]
    %v175 = vld [vmem:[#allocation7 + $0x58] sm:$0xff]
    %v176 = vld [vmem:[#allocation7 + $0x60] sm:$0xff]
    %v177 = vld [vmem:[#allocation7 + $0x68] sm:$0xff]
    %v178 = vld [vmem:[#allocation7 + $0x70] sm:$0xff]
    %v179 = vld [vmem:[#allocation7 + $0x78] sm:$0xff]
    %v180 = vld [vmem:[%s4] sm:$0x1]
    %v182 = vlaneseq
    %v183 = vshrl.u32 %v182, 7
    %v184 = vsub.s32 0, %v183
    %v185 = vrot.slane %v180, %v184
    %187 = vmatprep.subr.mxu0 0.0
    %188 = vmatpush1.msra.mxu0 %v164
    %189 = vmatprep.subr.mxu0 0.0
    %190 = vmatpush1.msra.mxu0 %v165
    %191 = vmatprep.subr.mxu0 0.0
    %192 = vmatpush1.msra.mxu0 %v166
    %193 = vmatprep.subr.mxu0 0.0
    %194 = vmatpush1.msra.mxu0 %v167
    %195 = vmatprep.subr.mxu0 0.0
    %196 = vmatpush1.msra.mxu0 %v168
    %197 = vmatprep.subr.mxu0 0.0
    %198 = vmatpush1.msra.mxu0 %v169
    %199 = vmatprep.subr.mxu0 0.0
    %200 = vmatpush1.msra.mxu0 %v170
    %201 = vmatprep.subr.mxu0 0.0
    %202 = vmatpush1.msra.mxu0 %v171
    %203 = vmatprep.subr.mxu0 0.0
    %204 = vmatpush1.msra.mxu0 %v172
    %205 = vmatprep.subr.mxu0 0.0
    %206 = vmatpush1.msra.mxu0 %v173
    %207 = vmatprep.subr.mxu0 0.0
    %208 = vmatpush1.msra.mxu0 %v174
    %209 = vmatprep.subr.mxu0 0.0
    %210 = vmatpush1.msra.mxu0 %v175
    %211 = vmatprep.subr.mxu0 0.0
    %212 = vmatpush1.msra.mxu0 %v176
    %213 = vmatprep.subr.mxu0 0.0
    %214 = vmatpush1.msra.mxu0 %v177
    %215 = vmatprep.subr.mxu0 0.0
    %216 = vmatpush1.msra.mxu0 %v178
    %217 = vmatprep.subr.mxu0 0.0
    %218 = vmatpush1.msra.mxu0 %v179
    %219 = vmatprep.subr.mxu0 0.0
    %220 = vmatpush1.msra.mxu0 0.0
    %221 = vmatprep.subr.mxu0 0.0
    %222 = vmatpush1.msra.mxu0 0.0
    %223 = vmatprep.subr.mxu0 0.0
    %224 = vmatpush1.msra.mxu0 0.0
    %225 = vmatprep.subr.mxu0 0.0
    %226 = vmatpush1.msra.mxu0 0.0
    %227 = vmatprep.subr.mxu0 0.0
    %228 = vmatpush1.msra.mxu0 0.0
    %229 = vmatprep.subr.mxu0 0.0
    %230 = vmatpush1.msra.mxu0 0.0
    %231 = vmatprep.subr.mxu0 0.0
    %232 = vmatpush1.msra.mxu0 0.0
    %233 = vmatprep.subr.mxu0 0.0
    %234 = vmatpush1.msra.mxu0 0.0
    %235 = vmatprep.subr.mxu0 0.0
    %236 = vmatpush1.msra.mxu0 0.0
    %237 = vmatprep.subr.mxu0 0.0
    %238 = vmatpush1.msra.mxu0 0.0
    %239 = vmatprep.subr.mxu0 0.0
    %240 = vmatpush1.msra.mxu0 0.0
    %241 = vmatprep.subr.mxu0 0.0
    %242 = vmatpush1.msra.mxu0 0.0
    %243 = vmatprep.subr.mxu0 0.0
    %244 = vmatpush1.msra.mxu0 0.0
    %245 = vmatprep.subr.mxu0 0.0
    %246 = vmatpush1.msra.mxu0 0.0
    %247 = vmatprep.subr.mxu0 0.0
    %248 = vmatpush1.msra.mxu0 0.0
    %249 = vmatprep.subr.mxu0 0.0
    %250 = vmatpush1.msra.mxu0 0.0
    %251 = vmatprep.mubr.f32.mxu0 0.0
    %252 = vmatmul.mubr.f32.gmra.mrb[0].mxu0 %v162
    %v253 = vpop.f32.mrb[0].mxu0
    %v254 = vadd.f32 %v185, %v253
    %v255 = vpop.f32.mrb[0].mxu0
    %256 = vmatprep.mubr.f32.mxu0 0.0
    %257 = vmatmul.mubr.f32.gmra.mrb[0].mxu0 %v163
    %v258 = vpop.f32.mrb[0].mxu0
    %v259 = vadd.f32 %v185, %v258
    %v260 = vpop.f32.mrb[0].mxu0
    %261 = vdwg.mxu0
    %v262 = vtanh.pop %v254
    %v263 = vtanh.pop %v259
    %v264 = vadd.f32 %v262, %v62
    %v265 = vadd.f32 %v263, %v63
    %266 = vst [vmem:[#allocation8] sm:$0xff] %v264
    %267 = vst [vmem:[#allocation8 + $0x8] sm:$0xff] %v265
    // Predicated region
    $region34: #{tpu_custom_call.1} parent=1 // pred_check
      _
    $region35: #{tpu_custom_call.1} parent=1 // pred_check_branch
      %269 = sbr.rel (0) target = $region37
    $region36: #{tpu_custom_call.1} parent=1 // pred_region
      %s271 = ssub.s32 256, 256
      %272 = vsyncadd [#allocation4], %s271
      %s273 = sshll.u32 [#allocation8], 4
      %s274 = int_to_ptr.vmem [resolvable:$true] %s273
      %279 = dma.vmem_to_hbm [thread:$0]  %s274, 256, %s5, [#allocation4], 128, 128, 8
    $region37: #{tpu_custom_call.1} parent=1 // pred_fallthru
      _
    // Predicated region
    $region38: #{tpu_custom_call.1} parent=1 // pred_check
      _
    $region39: #{tpu_custom_call.1} parent=1 // pred_check_branch
      %281 = sbr.rel (0) target = $region41
    $region40: #{tpu_custom_call.1} parent=1 // pred_region
      %282 = dma.done [#allocation4], 256
    $region41: #{tpu_custom_call.1} parent=1 // pred_fallthru
      _
    %283 = vsyncpa [#allocation3], 1
    %284 = vsyncpa [#allocation6], 1
    %285 = vsyncpa [#allocation4], 1

</llo_original>
